<compile_context>
chip_gen: v6e
topology: v6e:2x2x1
jax: 0.10.0
libtpu: 0.0.40
codegen_flags: <defaults>
</compile_context>

<pallas_src>
import functools

import jax
import jax.numpy as jnp
from jax.experimental import pallas as pl
from jax.experimental.pallas import tpu as pltpu

LANE = 128
SUBLANE = 8


def _round_up(x, m):
    return -(-x // m) * m


def _to_f32(x):
    # Only emit a convert when actually needed.
    return x if x.dtype == jnp.float32 else x.astype(jnp.float32)


def _default_num_shards():
    # Megacore sharding only pays on 2-TensorCore parts (v7x); on v5e/v6e the
    # shard axis is just a sequential outer loop (doubles finalize work).
    try:
        kind = jax.devices()[0].device_kind.lower()
    except Exception:
        return 1
    return 2 if "v7" in kind else 1


def _fs2_loss_kernel(mel_ref, mel_t_ref,
                     dur_ref, dur_t_ref,
                     pitch_ref, pitch_t_ref,
                     energy_ref, energy_t_ref,
                     out_ref, acc_ref, *,
                     tile_bt, n_rows, needs_mask,
                     dur_count, pitch_count, energy_count):
    shard = pl.program_id(0)
    step = pl.program_id(1)
    steps = pl.num_programs(1)
    last_step = steps - 1

    @pl.when(step == 0)
    def _init():
        acc_ref[...] = jnp.zeros_like(acc_ref)

    # --- mel L1: elementwise |a-b| accumulated into a full-tile f32 accumulator.
    #     No per-step reductions at all (pure VPU filler hidden under the DMAs);
    #     the single big collapse happens once per shard in the finalize branch.
    diff = jnp.abs(_to_f32(mel_ref[...]) - _to_f32(mel_t_ref[...]))
    if needs_mask:
        # Tail block / duplicated clamped block: mask by the logical row index
        # instead of trusting out-of-range block contents (unspecified).
        row0 = (shard * steps + step) * tile_bt
        rows = jax.lax.broadcasted_iota(jnp.int32, (tile_bt, 1), 0) + row0
        diff = jnp.where(rows < n_rows, diff, 0.0)
    acc_ref[...] += diff

    @pl.when(step == last_step)
    def _finalize_mel():
        out_ref[0, 0] = jnp.sum(acc_ref[...])   # unnormalized per-shard L1 sum

    # Tiny (B, T) MSE terms: computed once, on shard 0's last step, from the
    # whole-array-resident VMEM blocks.
    @pl.when(jnp.logical_and(step == last_step, shard == 0))
    def _finalize_small():
        dur_t = jnp.log1p(dur_t_ref[...].astype(jnp.float32))
        dd = _to_f32(dur_ref[...]) - dur_t
        out_ref[0, 1] = jnp.sum(dd * dd) * jnp.float32(1.0 / dur_count)
        pp = _to_f32(pitch_ref[...]) - _to_f32(pitch_t_ref[...])
        out_ref[0, 2] = jnp.sum(pp * pp) * jnp.float32(1.0 / pitch_count)
        ee = _to_f32(energy_ref[...]) - _to_f32(energy_t_ref[...])
        out_ref[0, 3] = jnp.sum(ee * ee) * jnp.float32(1.0 / energy_count)


def fastspeech_second_loss(mel, duration_prediction, pitch_prediction,
                           energy_prediction, mel_target,
                           duration_predictor_target, pitch_target,
                           energy_target, *,
                           block_bytes=4 * 1024 * 1024, num_shards=None):
    if num_shards is None:
        num_shards = _default_num_shards()
    num_shards = max(1, int(num_shards))

    mel_count = mel.size

    # --- free, contiguous 2-D view of the dominant mel term (no jnp.pad, no
    #     extra HBM copy; collapsing the leading dims of a row-major array is
    #     a bitcast for XLA).
    if mel.ndim >= 2:
        mel2d = mel.reshape(-1, mel.shape[-1])
        mel_t2d = mel_target.reshape(-1, mel_target.shape[-1])
    else:
        mel2d = mel.reshape(1, -1)
        mel_t2d = mel_target.reshape(1, -1)
    n_rows, m = mel2d.shape

    # --- tile planning: target ~block_bytes of VMEM per mel input block so the
    #     per-step DMA dwarfs the ~0.35 us/step grid overhead on every chip gen.
    lanes = _round_up(m, LANE)                       # VMEM lane-padded row width
    itemsize = jnp.dtype(mel2d.dtype).itemsize
    bytes_per_row = lanes * itemsize
    tile_bt = max(SUBLANE, (block_bytes // bytes_per_row) // SUBLANE * SUBLANE)
    tile_bt = min(tile_bt, _round_up(n_rows, SUBLANE))
    if num_shards > 1:
        # Keep a few reduction steps per shard so double-buffering has DMA to hide.
        tile_bt = min(tile_bt,
                      max(SUBLANE,
                          _round_up(pl.cdiv(n_rows, num_shards * 3), SUBLANE)))

    n_blocks = pl.cdiv(n_rows, tile_bt)
    steps = pl.cdiv(n_blocks, num_shards)
    needs_mask = (num_shards * steps * tile_bt) != n_rows

    if num_shards * steps == n_blocks:
        mel_idx = lambda s, i, _st=steps: (s * _st + i, 0)
    else:
        # Clamp over-range shard blocks to the last real block (their
        # contribution is masked to zero in-kernel), so no DMA ever starts OOB.
        mel_idx = lambda s, i, _st=steps, _last=n_blocks - 1: (
            jnp.minimum(s * _st + i, _last), 0)
    mel_spec = pl.BlockSpec((tile_bt, m), mel_idx)

    small_inputs = (duration_prediction, duration_predictor_target,
                    pitch_prediction, pitch_target,
                    energy_prediction, energy_target)
    small_specs = [
        pl.BlockSpec(a.shape, lambda s, i, _nd=a.ndim: (0,) * _nd)
        for a in small_inputs
    ]

    kernel = functools.partial(
        _fs2_loss_kernel,
        tile_bt=tile_bt, n_rows=n_rows, needs_mask=needs_mask,
        dur_count=duration_prediction.size,
        pitch_count=pitch_prediction.size,
        energy_count=energy_prediction.size)

    # VMEM budget: 2 mel inputs x 2 pipeline buffers + the full-tile f32 acc.
    acc_bytes = tile_bt * lanes * 4
    in_bytes = 2 * 2 * tile_bt * lanes * itemsize
    vmem_limit = min(64 * 1024 * 1024,
                     max(32 * 1024 * 1024,
                         int(1.25 * (in_bytes + acc_bytes)) + 2 * 1024 * 1024))

    out = pl.pallas_call(
        kernel,
        out_shape=jax.ShapeDtypeStruct((num_shards, 4), jnp.float32),
        grid=(num_shards, steps),
        in_specs=[mel_spec, mel_spec] + small_specs,
        out_specs=pl.BlockSpec((1, 4), lambda s, i: (s, 0),
                               memory_space=pltpu.MemorySpace.SMEM),
        scratch_shapes=[pltpu.VMEM((tile_bt, m), jnp.float32)],
        compiler_params=pltpu.CompilerParams(
            dimension_semantics=("parallel", "arbitrary"),
            vmem_limit_bytes=vmem_limit),
    )(mel2d, mel_t2d, *small_inputs)

    # Combine per-shard mel partial sums and normalize by the *global* count
    # (masked rows contributed exactly zero to the sum).
    mel_loss = jnp.sum(out[:, 0]) / jnp.float32(mel_count)
    return mel_loss, out[0, 1], out[0, 2], out[0, 3]


def _reference(mel, dur, pitch, energy, mel_t, dur_t, pitch_t, energy_t):
    mel_loss = jnp.mean(jnp.abs(mel - mel_t))
    dur_loss = jnp.mean((dur - jnp.log1p(dur_t.astype(jnp.float32))) ** 2)
    pitch_loss = jnp.mean((pitch - pitch_t.astype(jnp.float32)) ** 2)
    energy_loss = jnp.mean((energy - energy_t.astype(jnp.float32)) ** 2)
    return mel_loss, dur_loss, pitch_loss, energy_loss


if __name__ == "__main__":
    key = jax.random.PRNGKey(0)
    B, T, N_MELS = 2, 8, 32

    ks = jax.random.split(key, 8)
    mel = jax.random.normal(ks[0], (B, T, N_MELS), dtype=jnp.float32)
    mel_target = jax.random.normal(ks[1], (B, T, N_MELS), dtype=jnp.float32)
    duration_prediction = jax.random.normal(ks[2], (B, T), dtype=jnp.float32)
    duration_predictor_target = jax.random.randint(ks[3], (B, T), 0, 10, dtype=jnp.int32)
    pitch_prediction = jax.random.normal(ks[4], (B, T), dtype=jnp.float32)
    pitch_target = jax.random.normal(ks[5], (B, T), dtype=jnp.float32)
    energy_prediction = jax.random.normal(ks[6], (B, T), dtype=jnp.float32)
    energy_target = jax.random.normal(ks[7], (B, T), dtype=jnp.float32)

    out = fastspeech_second_loss(
        mel, duration_prediction, pitch_prediction, energy_prediction,
        mel_target, duration_predictor_target, pitch_target, energy_target)
    out = jax.block_until_ready(out)

    ref = _reference(
        mel, duration_prediction, pitch_prediction, energy_prediction,
        mel_target, duration_predictor_target, pitch_target, energy_target)

    for got, want in zip(out, ref):
        assert jnp.allclose(got, want, rtol=1e-5, atol=1e-5), (got, want)

    print("KERNEL_OK")
</pallas_src>

<mosaic_0001>
module attributes {stable_mosaic.version = 11 : i64} {
  func.func @_fs2_loss_kernel(%arg0: i32, %arg1: i32, %arg2: memref<16x32xf32, #tpu.memory_space<vmem>>, %arg3: memref<16x32xf32, #tpu.memory_space<vmem>>, %arg4: memref<2x8xf32, #tpu.memory_space<vmem>>, %arg5: memref<2x8xi32, #tpu.memory_space<vmem>>, %arg6: memref<2x8xf32, #tpu.memory_space<vmem>>, %arg7: memref<2x8xf32, #tpu.memory_space<vmem>>, %arg8: memref<2x8xf32, #tpu.memory_space<vmem>>, %arg9: memref<2x8xf32, #tpu.memory_space<vmem>>, %arg10: memref<1x4xf32, #tpu.memory_space<smem>>, %arg11: memref<16x32xf32, #tpu.memory_space<vmem>>) attributes {dimension_semantics = [#tpu.dimension_semantics<parallel>, #tpu.dimension_semantics<arbitrary>], iteration_bounds = array<i64: 1, 1>, scalar_prefetch = 0 : i64, scratch_operands = 1 : i64, tpu.core_type = #tpu.core_type<tc>, window_params = [{transform_indices = @transform_0, window_bounds = array<i64: 16, 32>}, {transform_indices = @transform_1, window_bounds = array<i64: 16, 32>}, {pipeline_mode = #tpu.pipeline_mode<synchronous>, transform_indices = @transform_2, window_bounds = array<i64: 2, 8>}, {pipeline_mode = #tpu.pipeline_mode<synchronous>, transform_indices = @transform_3, window_bounds = array<i64: 2, 8>}, {pipeline_mode = #tpu.pipeline_mode<synchronous>, transform_indices = @transform_4, window_bounds = array<i64: 2, 8>}, {pipeline_mode = #tpu.pipeline_mode<synchronous>, transform_indices = @transform_5, window_bounds = array<i64: 2, 8>}, {pipeline_mode = #tpu.pipeline_mode<synchronous>, transform_indices = @transform_6, window_bounds = array<i64: 2, 8>}, {pipeline_mode = #tpu.pipeline_mode<synchronous>, transform_indices = @transform_7, window_bounds = array<i64: 2, 8>}, {transform_indices = @transform_8, window_bounds = array<i64: 1, 4>}]} {
    %c0_i32 = arith.constant 0 : i32
    %0 = arith.cmpi eq, %arg1, %c0_i32 : i32
    %1 = arith.extui %0 : i1 to i32
    %c0_i32_0 = arith.constant 0 : i32
    %2 = arith.cmpi ne, %1, %c0_i32_0 : i32
    scf.if %2 {
      %cst = arith.constant 0.000000e+00 : f32
      %18 = vector.broadcast %cst : f32 to vector<16x32xf32>
      %c0_13 = arith.constant 0 : index
      %c0_14 = arith.constant 0 : index
      %19 = vector.load %arg11[%c0_13, %c0_14] : memref<16x32xf32, #tpu.memory_space<vmem>>, vector<16x32xf32>
      tpu.vector_store %arg11[%c0_13, %c0_14], %18 {strides = array<i32>} : memref<16x32xf32, #tpu.memory_space<vmem>>, vector<16x32xf32>,
    } else {
    }
    %c0 = arith.constant 0 : index
    %c0_1 = arith.constant 0 : index
    %3 = vector.load %arg2[%c0, %c0_1] : memref<16x32xf32, #tpu.memory_space<vmem>>, vector<16x32xf32>
    %c0_2 = arith.constant 0 : index
    %c0_3 = arith.constant 0 : index
    %4 = vector.load %arg3[%c0_2, %c0_3] : memref<16x32xf32, #tpu.memory_space<vmem>>, vector<16x32xf32>
    %5 = arith.subf %3, %4 : vector<16x32xf32>
    %6 = math.absf %5 : vector<16x32xf32>
    %c0_4 = arith.constant 0 : index
    %c0_5 = arith.constant 0 : index
    %7 = vector.load %arg11[%c0_4, %c0_5] : memref<16x32xf32, #tpu.memory_space<vmem>>, vector<16x32xf32>
    %8 = arith.addf %7, %6 : vector<16x32xf32>
    %c0_6 = arith.constant 0 : index
    %c0_7 = arith.constant 0 : index
    %9 = vector.load %arg11[%c0_6, %c0_7] : memref<16x32xf32, #tpu.memory_space<vmem>>, vector<16x32xf32>
    tpu.vector_store %arg11[%c0_6, %c0_7], %8 {strides = array<i32>} : memref<16x32xf32, #tpu.memory_space<vmem>>, vector<16x32xf32>,
    %c0_i32_8 = arith.constant 0 : i32
    %10 = arith.cmpi eq, %arg1, %c0_i32_8 : i32
    %11 = arith.extui %10 : i1 to i32
    %c0_i32_9 = arith.constant 0 : i32
    %12 = arith.cmpi ne, %11, %c0_i32_9 : i32
    scf.if %12 {
      %c0_13 = arith.constant 0 : index
      %c0_14 = arith.constant 0 : index
      %18 = vector.load %arg11[%c0_13, %c0_14] : memref<16x32xf32, #tpu.memory_space<vmem>>, vector<16x32xf32>
      %19 = vector.shape_cast %18 : vector<16x32xf32> to vector<1x16x32xf32>
      %cst = arith.constant dense<0.000000e+00> : vector<1xf32>
      %20 = vector.multi_reduction <add>, %19, %cst [1, 2] : vector<1x16x32xf32> to vector<1xf32>
      %21 = vector.shape_cast %20 : vector<1xf32> to vector<1x1x1xf32>
      %22 = vector.extract %21[0, 0, 0] : f32 from vector<1x1x1xf32>
      %c0_15 = arith.constant 0 : index
      %c0_16 = arith.constant 0 : index
      %23 = memref.load %arg10[%c0_15, %c0_16] : memref<1x4xf32, #tpu.memory_space<smem>>
      memref.store %22, %arg10[%c0_15, %c0_16] : memref<1x4xf32, #tpu.memory_space<smem>>
    } else {
    }
    %c0_i32_10 = arith.constant 0 : i32
    %13 = arith.cmpi eq, %arg1, %c0_i32_10 : i32
    %c0_i32_11 = arith.constant 0 : i32
    %14 = arith.cmpi eq, %arg0, %c0_i32_11 : i32
    %15 = arith.andi %13, %14 : i1
    %16 = arith.extui %15 : i1 to i32
    %c0_i32_12 = arith.constant 0 : i32
    %17 = arith.cmpi ne, %16, %c0_i32_12 : i32
    scf.if %17 {
      %c0_13 = arith.constant 0 : index
      %c0_14 = arith.constant 0 : index
      %18 = vector.load %arg5[%c0_13, %c0_14] : memref<2x8xi32, #tpu.memory_space<vmem>>, vector<2x8xi32>
      %19 = arith.sitofp %18 : vector<2x8xi32> to vector<2x8xf32>
      %20 = math.log1p %19 : vector<2x8xf32>
      %c0_15 = arith.constant 0 : index
      %c0_16 = arith.constant 0 : index
      %21 = vector.load %arg4[%c0_15, %c0_16] : memref<2x8xf32, #tpu.memory_space<vmem>>, vector<2x8xf32>
      %22 = arith.subf %21, %20 : vector<2x8xf32>
      %23 = arith.mulf %22, %22 : vector<2x8xf32>
      %24 = vector.shape_cast %23 : vector<2x8xf32> to vector<1x2x8xf32>
      %cst = arith.constant dense<0.000000e+00> : vector<1xf32>
      %25 = vector.multi_reduction <add>, %24, %cst [1, 2] : vector<1x2x8xf32> to vector<1xf32>
      %26 = vector.shape_cast %25 : vector<1xf32> to vector<1x1x1xf32>
      %27 = vector.extract %26[0, 0, 0] : f32 from vector<1x1x1xf32>
      %cst_17 = arith.constant 6.250000e-02 : f32
      %28 = arith.mulf %27, %cst_17 : f32
      %c0_18 = arith.constant 0 : index
      %c1 = arith.constant 1 : index
      %29 = memref.load %arg10[%c0_18, %c1] : memref<1x4xf32, #tpu.memory_space<smem>>
      memref.store %28, %arg10[%c0_18, %c1] : memref<1x4xf32, #tpu.memory_space<smem>>
      %c0_19 = arith.constant 0 : index
      %c0_20 = arith.constant 0 : index
      %30 = vector.load %arg6[%c0_19, %c0_20] : memref<2x8xf32, #tpu.memory_space<vmem>>, vector<2x8xf32>
      %c0_21 = arith.constant 0 : index
      %c0_22 = arith.constant 0 : index
      %31 = vector.load %arg7[%c0_21, %c0_22] : memref<2x8xf32, #tpu.memory_space<vmem>>, vector<2x8xf32>
      %32 = arith.subf %30, %31 : vector<2x8xf32>
      %33 = arith.mulf %32, %32 : vector<2x8xf32>
      %34 = vector.shape_cast %33 : vector<2x8xf32> to vector<1x2x8xf32>
      %cst_23 = arith.constant dense<0.000000e+00> : vector<1xf32>
      %35 = vector.multi_reduction <add>, %34, %cst_23 [1, 2] : vector<1x2x8xf32> to vector<1xf32>
      %36 = vector.shape_cast %35 : vector<1xf32> to vector<1x1x1xf32>
      %37 = vector.extract %36[0, 0, 0] : f32 from vector<1x1x1xf32>
      %cst_24 = arith.constant 6.250000e-02 : f32
      %38 = arith.mulf %37, %cst_24 : f32
      %c0_25 = arith.constant 0 : index
      %c2 = arith.constant 2 : index
      %39 = memref.load %arg10[%c0_25, %c2] : memref<1x4xf32, #tpu.memory_space<smem>>
      memref.store %38, %arg10[%c0_25, %c2] : memref<1x4xf32, #tpu.memory_space<smem>>
      %c0_26 = arith.constant 0 : index
      %c0_27 = arith.constant 0 : index
      %40 = vector.load %arg8[%c0_26, %c0_27] : memref<2x8xf32, #tpu.memory_space<vmem>>, vector<2x8xf32>
      %c0_28 = arith.constant 0 : index
      %c0_29 = arith.constant 0 : index
      %41 = vector.load %arg9[%c0_28, %c0_29] : memref<2x8xf32, #tpu.memory_space<vmem>>, vector<2x8xf32>
      %42 = arith.subf %40, %41 : vector<2x8xf32>
      %43 = arith.mulf %42, %42 : vector<2x8xf32>
      %44 = vector.shape_cast %43 : vector<2x8xf32> to vector<1x2x8xf32>
      %cst_30 = arith.constant dense<0.000000e+00> : vector<1xf32>
      %45 = vector.multi_reduction <add>, %44, %cst_30 [1, 2] : vector<1x2x8xf32> to vector<1xf32>
      %46 = vector.shape_cast %45 : vector<1xf32> to vector<1x1x1xf32>
      %47 = vector.extract %46[0, 0, 0] : f32 from vector<1x1x1xf32>
      %cst_31 = arith.constant 6.250000e-02 : f32
      %48 = arith.mulf %47, %cst_31 : f32
      %c0_32 = arith.constant 0 : index
      %c3 = arith.constant 3 : index
      %49 = memref.load %arg10[%c0_32, %c3] : memref<1x4xf32, #tpu.memory_space<smem>>
      memref.store %48, %arg10[%c0_32, %c3] : memref<1x4xf32, #tpu.memory_space<smem>>
    } else {
    }
    return
  }
  func.func @transform_0(%arg0: i32, %arg1: i32) -> (i32, i32) {
    %c1_i32 = arith.constant 1 : i32
    %0 = arith.muli %arg0, %c1_i32 : i32
    %1 = arith.addi %0, %arg1 : i32
    %c0_i32 = arith.constant 0 : i32
    %c0_i32_0 = arith.constant 0 : i32
    return %1, %c0_i32 : i32, i32
  }
  func.func @transform_1(%arg0: i32, %arg1: i32) -> (i32, i32) {
    %c1_i32 = arith.constant 1 : i32
    %0 = arith.muli %arg0, %c1_i32 : i32
    %1 = arith.addi %0, %arg1 : i32
    %c0_i32 = arith.constant 0 : i32
    %c0_i32_0 = arith.constant 0 : i32
    return %1, %c0_i32 : i32, i32
  }
  func.func @transform_2(%arg0: i32, %arg1: i32) -> (i32, i32) {
    %c0_i32 = arith.constant 0 : i32
    %c0_i32_0 = arith.constant 0 : i32
    %c0_i32_1 = arith.constant 0 : i32
    return %c0_i32, %c0_i32_0 : i32, i32
  }
  func.func @transform_3(%arg0: i32, %arg1: i32) -> (i32, i32) {
    %c0_i32 = arith.constant 0 : i32
    %c0_i32_0 = arith.constant 0 : i32
    %c0_i32_1 = arith.constant 0 : i32
    return %c0_i32, %c0_i32_0 : i32, i32
  }
  func.func @transform_4(%arg0: i32, %arg1: i32) -> (i32, i32) {
    %c0_i32 = arith.constant 0 : i32
    %c0_i32_0 = arith.constant 0 : i32
    %c0_i32_1 = arith.constant 0 : i32
    return %c0_i32, %c0_i32_0 : i32, i32
  }
  func.func @transform_5(%arg0: i32, %arg1: i32) -> (i32, i32) {
    %c0_i32 = arith.constant 0 : i32
    %c0_i32_0 = arith.constant 0 : i32
    %c0_i32_1 = arith.constant 0 : i32
    return %c0_i32, %c0_i32_0 : i32, i32
  }
  func.func @transform_6(%arg0: i32, %arg1: i32) -> (i32, i32) {
    %c0_i32 = arith.constant 0 : i32
    %c0_i32_0 = arith.constant 0 : i32
    %c0_i32_1 = arith.constant 0 : i32
    return %c0_i32, %c0_i32_0 : i32, i32
  }
  func.func @transform_7(%arg0: i32, %arg1: i32) -> (i32, i32) {
    %c0_i32 = arith.constant 0 : i32
    %c0_i32_0 = arith.constant 0 : i32
    %c0_i32_1 = arith.constant 0 : i32
    return %c0_i32, %c0_i32_0 : i32, i32
  }
  func.func @transform_8(%arg0: i32, %arg1: i32) -> (i32, i32) {
    %c0_i32 = arith.constant 0 : i32
    %c0_i32_0 = arith.constant 0 : i32
    return %arg0, %c0_i32 : i32, i32
  }
}

</mosaic_0001>

<llo_original>
// kernel: tpu_custom_call.1
$region0: #{tpu_custom_call.1}
  #allocation0 [shape = 'u32[]', space=smem, size = 0x4, offset = 0x4, fixed_abs, tag = 'smem constant byte address 0x4 - core index']
  #allocation1 [shape = 'u32[144,128]{1,0:T(1,128)}', space=vmem, size = 0x12000, scoped, tag = 'internal scratch']
  #allocation2 [shape = 'f32[16,32]{1,0:T(8,128)}', space=vmem, size = 0x2000, scoped, tag = 'scratch operand']
  %s0 = inlined_call_operand.hbm [shape: f32[16,32], index: 0, kind: input, shape index: {}]
  %s1 = inlined_call_operand.hbm [shape: f32[16,32], index: 1, kind: input, shape index: {}]
  %s2 = inlined_call_operand.vmem [shape: f32[2,8], index: 2, kind: input, shape index: {}]
  %s3 = inlined_call_operand.vmem [shape: s32[2,8], index: 3, kind: input, shape index: {}]
  %s4 = inlined_call_operand.vmem [shape: f32[2,8], index: 4, kind: input, shape index: {}]
  %s5 = inlined_call_operand.vmem [shape: f32[2,8], index: 5, kind: input, shape index: {}]
  %s6 = inlined_call_operand.vmem [shape: f32[2,8], index: 6, kind: input, shape index: {}]
  %s7 = inlined_call_operand.vmem [shape: f32[2,8], index: 7, kind: input, shape index: {}]
  %s8 = inlined_call_operand.hbm [shape: f32[1,4], index: 8, kind: output, shape index: {}]
  %s9 = sld [smem:[#allocation0]]
  $region62: #{tpu_custom_call.1} parent=0
    _
  %s11 = ssub.s32 1, %s9
  %s12 = scalar_select 0, %s11, %s9
  $region1: #{tpu_custom_call.1} parent=0
    #allocation3 [shape = 'u8[8192]{0}', space=vmem, size = 0x2000, scoped, tag = 'input window, operand 0, single buffered']
    #allocation4 [shape = 's32[1]{0}', space=sflag, size = 0x4, scoped, tag = 'scoped memory for tpu_custom_call.1']
    #allocation5 [shape = 's32[1]{0}', space=sflag, size = 0x4, scoped, tag = 'scoped memory for tpu_custom_call.1']
    #allocation6 [shape = 'u8[8192]{0}', space=vmem, size = 0x2000, scoped, tag = 'input window, operand 1, single buffered']
    #allocation7 [shape = 's32[1]{0}', space=sflag, size = 0x4, scoped, tag = 'scoped memory for tpu_custom_call.1']
    #allocation8 [shape = 'u8[512]{0}', space=smem, size = 0x200, scoped, tag = 'output window, operand 0, single buffered']
    %13 = vsyncpa [#allocation4], 0
    %14 = vsyncpa [#allocation7], 0
    %15 = vsyncpa [#allocation5], 0
    // Predicated region
    $region2: #{tpu_custom_call.1} parent=1 // pred_check
      _
    $region3: #{tpu_custom_call.1} parent=1 // pred_check_branch
      %17 = sbr.rel (0) target = $region5
    $region4: #{tpu_custom_call.1} parent=1 // pred_region
      %s18 = sadd.s32 0, 0
      %s19 = smul.u32 2, %s18
      %s21 = ssub.s32 256, 256
      %22 = vsyncadd [#allocation4], %s21
      %s23 = smul.addr %s19, 128
      %s24 = scalar_lea.hbm %s0, %s23
      %s25 = sshll.u32 [#allocation3], 4
      %s26 = int_to_ptr.vmem [resolvable:$true] %s25
      %31 = dma.hbm_to_vmem [thread:$0]  %s24, 256, %s26, [#allocation4], 128, 128, 8
    $region5: #{tpu_custom_call.1} parent=1 // pred_fallthru
      _
    // Predicated region
    $region6: #{tpu_custom_call.1} parent=1 // pred_check
      _
    $region7: #{tpu_custom_call.1} parent=1 // pred_check_branch
      %33 = sbr.rel (0) target = $region9
    $region8: #{tpu_custom_call.1} parent=1 // pred_region
      %s34 = sadd.s32 0, 0
      %s35 = smul.u32 2, %s34
      %s37 = ssub.s32 256, 256
      %38 = vsyncadd [#allocation7], %s37
      %s39 = smul.addr %s35, 128
      %s40 = scalar_lea.hbm %s1, %s39
      %s41 = sshll.u32 [#allocation6], 4
      %s42 = int_to_ptr.vmem [resolvable:$true] %s41
      %47 = dma.hbm_to_vmem [thread:$0]  %s40, 256, %s42, [#allocation7], 128, 128, 8
    $region9: #{tpu_custom_call.1} parent=1 // pred_fallthru
      _
    // Predicated region
    $region10: #{tpu_custom_call.1} parent=1 // pred_check
      _
    $region11: #{tpu_custom_call.1} parent=1 // pred_check_branch
      %49 = sbr.rel (0) target = $region13
    $region12: #{tpu_custom_call.1} parent=1 // pred_region
      _
    $region13: #{tpu_custom_call.1} parent=1 // pred_fallthru
      _
    // Predicated region
    $region14: #{tpu_custom_call.1} parent=1 // pred_check
      _
    $region15: #{tpu_custom_call.1} parent=1 // pred_check_branch
      %51 = sbr.rel (0) target = $region17
    $region16: #{tpu_custom_call.1} parent=1 // pred_region
      _
    $region17: #{tpu_custom_call.1} parent=1 // pred_fallthru
      _
    // Predicated region
    $region18: #{tpu_custom_call.1} parent=1 // pred_check
      _
    $region19: #{tpu_custom_call.1} parent=1 // pred_check_branch
      %53 = sbr.rel (0) target = $region21
    $region20: #{tpu_custom_call.1} parent=1 // pred_region
      _
    $region21: #{tpu_custom_call.1} parent=1 // pred_fallthru
      _
    // Predicated region
    $region22: #{tpu_custom_call.1} parent=1 // pred_check
      _
    $region23: #{tpu_custom_call.1} parent=1 // pred_check_branch
      %55 = sbr.rel (0) target = $region25
    $region24: #{tpu_custom_call.1} parent=1 // pred_region
      _
    $region25: #{tpu_custom_call.1} parent=1 // pred_fallthru
      _
    // Predicated region
    $region26: #{tpu_custom_call.1} parent=1 // pred_check
      _
    $region27: #{tpu_custom_call.1} parent=1 // pred_check_branch
      %57 = sbr.rel (0) target = $region29
    $region28: #{tpu_custom_call.1} parent=1 // pred_region
      _
    $region29: #{tpu_custom_call.1} parent=1 // pred_fallthru
      _
    // Predicated region
    $region30: #{tpu_custom_call.1} parent=1 // pred_check
      _
    $region31: #{tpu_custom_call.1} parent=1 // pred_check_branch
      %59 = sbr.rel (0) target = $region33
    $region32: #{tpu_custom_call.1} parent=1 // pred_region
      _
    $region33: #{tpu_custom_call.1} parent=1 // pred_fallthru
      _
    // Predicated region
    $region34: #{tpu_custom_call.1} parent=1 // pred_check
      _
    $region35: #{tpu_custom_call.1} parent=1 // pred_check_branch
      %61 = sbr.rel (0) target = $region37
    $region36: #{tpu_custom_call.1} parent=1 // pred_region
      %62 = dma.done [#allocation4], 256
    $region37: #{tpu_custom_call.1} parent=1 // pred_fallthru
      _
    // Predicated region
    $region38: #{tpu_custom_call.1} parent=1 // pred_check
      _
    $region39: #{tpu_custom_call.1} parent=1 // pred_check_branch
      %64 = sbr.rel (0) target = $region41
    $region40: #{tpu_custom_call.1} parent=1 // pred_region
      %65 = dma.done [#allocation7], 256
    $region41: #{tpu_custom_call.1} parent=1 // pred_fallthru
      _
    %s66 = sadd.s32 0, 0
    %s67 = smul.u32 2, %s66
    %s68 = sadd.s32 0, 0
    %s69 = smul.u32 2, %s68
    %p70 = scmp.eq.s32.totalorder 0, 0
    // Predicated region
    $region42: #{tpu_custom_call.1} parent=1 // pred_check
      %p71 = pneg %p70
    $region43: #{tpu_custom_call.1} parent=1 // pred_check_branch
      %73 = sbr.rel (%p71) target = $region45
    $region44: #{tpu_custom_call.1} parent=1 // pred_region
      %vm74 = vcmask 261120
      %75 = vst.msk [vmem:[#allocation2] sm:$0xff] %vm74, 0.0
      %76 = vst.msk [vmem:[#allocation2 + $0x8] sm:$0xff] %vm74, 0.0
    $region45: #{tpu_custom_call.1} parent=1 // pred_fallthru
      _
    %v77 = vld [vmem:[#allocation3] sm:$0xff]
    %v78 = vld [vmem:[#allocation3 + $0x8] sm:$0xff]
    %v79 = vld [vmem:[#allocation6] sm:$0xff]
    %v80 = vld [vmem:[#allocation6 + $0x8] sm:$0xff]
    %v81 = vsub.f32 %v77, %v79
    %v82 = vsub.f32 %v78, %v80
    %v83 = vand.u32 2147483647, %v81
    %v84 = vand.u32 2147483647, %v82
    %v85 = vld [vmem:[#allocation2] sm:$0xff]
    %v86 = vld [vmem:[#allocation2 + $0x8] sm:$0xff]
    %v87 = vadd.f32 %v85, %v83
    %v88 = vadd.f32 %v86, %v84
    %vm89 = vcmask 261120
    %90 = vst.msk [vmem:[#allocation2] sm:$0xff] %vm89, %v87
    %91 = vst.msk [vmem:[#allocation2 + $0x8] sm:$0xff] %vm89, %v88
    // Predicated region
    $region46: #{tpu_custom_call.1} parent=1 // pred_check
      %p92 = pneg %p70
    $region47: #{tpu_custom_call.1} parent=1 // pred_check_branch
      %94 = sbr.rel (%p92) target = $region49
    $region48: #{tpu_custom_call.1} parent=1 // pred_region
      %v95 = vld [vmem:[#allocation2] sm:$0xff]
      %v96 = vld [vmem:[#allocation2 + $0x8] sm:$0xff]
      %v97 = vsel %vm89, %v95, 0.0
      %v98 = vsel %vm89, %v96, 0.0
      %v99 = vadd.f32 %v97, %v98
      %100 = vadd.xlane.f32.xlu0 %v99
      %v101 = vpop.xlane.xlu0 %100
      %v102 = vrot.slane %v101, 4
      %v103 = vadd.f32 %v101, %v102
      %v104 = vrot.slane %v103, 2
      %v105 = vadd.f32 %v103, %v104
      %v106 = vrot.slane %v105, 1
      %v107 = vadd.f32 %v105, %v106
      %s108 = vtos %v107
      %s109 = scalar_lea.smem [#allocation8], 0
      %110 = sst [smem:[%s109]] %s108
    $region49: #{tpu_custom_call.1} parent=1 // pred_fallthru
      _
    %p111 = scmp.eq.s32.totalorder 0, 0
    %p112 = pnand %p70, %p111
    %p113 = pneg %p112
    // Predicated region
    $region50: #{tpu_custom_call.1} parent=1 // pred_check
      _
    $region51: #{tpu_custom_call.1} parent=1 // pred_check_branch
      %115 = sbr.rel (%p112) target = $region53
    $region52: #{tpu_custom_call.1} parent=1 // pred_region
      %v116 = vld [vmem:[%s3] sm:$0x3]
      %v117 = vcvt.s32.f32 %v116
      %v118 = vadd.f32 %v117, 1.0
      %v119 = vlog2.pop %v118
      %v120 = vmul.f32 %v119, 0.6931472
      %v121 = vmul.f32 -0.5, %v117
      %v122 = vadd.f32 %v121, 1.0
      %v123 = vmul.f32 %v122, %v117
      %v124 = vand.u32 2147483647, %v117
      %vm125 = vcmp.lt.f32.partialorder %v124, 0.0004427343
      %v126 = vsel %vm125, %v123, %v120
      %v127 = vld [vmem:[%s2] sm:$0x3]
      %v128 = vsub.f32 %v127, %v126
      %v129 = vmul.f32 %v128, %v128
      %vm130 = vcmask 58368
      %v131 = vsel %vm130, %v129, 0.0
      %132 = vadd.xlane.f32.xlu0 %v131
      %v133 = vpop.xlane.xlu0 %132
      %v134 = vrot.slane %v133, 4
      %v135 = vadd.f32 %v133, %v134
      %v136 = vrot.slane %v135, 2
      %v137 = vadd.f32 %v135, %v136
      %v138 = vrot.slane %v137, 1
      %v139 = vadd.f32 %v137, %v138
      %s140 = vtos %v139
      %s141 = smul.f32 %s140, 0.0625
      %s142 = scalar_lea.smem [#allocation8], 1
      %143 = sst [smem:[%s142]] %s141
      %v144 = vld [vmem:[%s4] sm:$0x3]
      %v145 = vld [vmem:[%s5] sm:$0x3]
      %v146 = vsub.f32 %v144, %v145
      %v147 = vmul.f32 %v146, %v146
      %v148 = vsel %vm130, %v147, 0.0
      %149 = vadd.xlane.f32.xlu0 %v148
      %v150 = vpop.xlane.xlu0 %149
      %v151 = vrot.slane %v150, 4
      %v152 = vadd.f32 %v150, %v151
      %v153 = vrot.slane %v152, 2
      %v154 = vadd.f32 %v152, %v153
      %v155 = vrot.slane %v154, 1
      %v156 = vadd.f32 %v154, %v155
      %s157 = vtos %v156
      %s158 = smul.f32 %s157, 0.0625
      %s159 = scalar_lea.smem [#allocation8], 2
      %160 = sst [smem:[%s159]] %s158
      %v161 = vld [vmem:[%s6] sm:$0x3]
      %v162 = vld [vmem:[%s7] sm:$0x3]
      %v163 = vsub.f32 %v161, %v162
      %v164 = vmul.f32 %v163, %v163
      %v165 = vsel %vm130, %v164, 0.0
      %166 = vadd.xlane.f32.xlu0 %v165
      %v167 = vpop.xlane.xlu0 %166
      %v168 = vrot.slane %v167, 4
      %v169 = vadd.f32 %v167, %v168
      %v170 = vrot.slane %v169, 2
      %v171 = vadd.f32 %v169, %v170
      %v172 = vrot.slane %v171, 1
      %v173 = vadd.f32 %v171, %v172
      %s174 = vtos %v173
      %s175 = smul.f32 %s174, 0.0625
      %s176 = scalar_lea.smem [#allocation8], 3
      %177 = sst [smem:[%s176]] %s175
    $region53: #{tpu_custom_call.1} parent=1 // pred_fallthru
      _
    // Predicated region
    $region54: #{tpu_custom_call.1} parent=1 // pred_check
      _
    $region55: #{tpu_custom_call.1} parent=1 // pred_check_branch
      %179 = sbr.rel (0) target = $region57
    $region56: #{tpu_custom_call.1} parent=1 // pred_region
      %s181 = ssub.s32 16, 16
      %182 = vsyncadd [#allocation5], %s181
      %185 = dma.smem_to_hbm [#allocation8], 16, %s8, [#allocation5]
    $region57: #{tpu_custom_call.1} parent=1 // pred_fallthru
      _
    // Predicated region
    $region58: #{tpu_custom_call.1} parent=1 // pred_check
      _
    $region59: #{tpu_custom_call.1} parent=1 // pred_check_branch
      %187 = sbr.rel (0) target = $region61
    $region60: #{tpu_custom_call.1} parent=1 // pred_region
      %188 = dma.done [#allocation5], 16
    $region61: #{tpu_custom_call.1} parent=1 // pred_fallthru
      _
    %189 = sfence
    %190 = vsyncpa [#allocation4], 1
    %191 = vsyncpa [#allocation7], 1
    %192 = vsyncpa [#allocation5], 1

</llo_original>
